<compile_context>
chip_gen: v5e
topology: v5e:2x2
jax: 0.10.0
libtpu: 0.0.40
codegen_flags: <defaults>
</compile_context>

<pallas_src>
import functools

import jax
import jax.numpy as jnp
from jax.experimental import pallas as pl
from jax.experimental.pallas import tpu as pltpu


# ---------------------------------------------------------------------------
# Kernels
# ---------------------------------------------------------------------------


def _pool_proj_kernel_full(x_ref, proj_ref, o_ref, *, inv_hw):
    """Preferred path: one contiguous (tile_n, C, H*W) block, 1-D batch grid.

    x_ref:    (tile_n, C, HW)      full-spatial input tile
    proj_ref: (C, out_dim)         grid-invariant projection block
    o_ref:    (1, tile_n, out_dim) output tile
    """
    # Single cross-lane reduce per batch tile (f32 accumulation fused in).
    pooled = jnp.sum(x_ref[...], axis=-1, dtype=jnp.float32) * inv_hw   # (tile_n, C)
    pooled = pooled.astype(proj_ref.dtype)
    out = jnp.dot(pooled, proj_ref[...], preferred_element_type=jnp.float32)
    o_ref[0] = out.astype(o_ref.dtype)


def _pool_proj_kernel_split(x_ref, proj_ref, o_ref, acc_ref, *,
                            inv_hw, hw, tile_hw, needs_mask):
    """Fallback path: spatial reduction grid axis + lane-wide f32 accumulator.

    x_ref:    (tile_n, C, tile_hw)  spatial slice of the input
    proj_ref: (C, out_dim)          grid-invariant projection block
    o_ref:    (1, tile_n, out_dim)  output tile (resident across spatial axis)
    acc_ref:  (tile_n, C, 128) f32  lane-wide partial-sum accumulator
    """
    k = pl.program_id(1)

    @pl.when(k == 0)
    def _init():
        acc_ref[...] = jnp.zeros_like(acc_ref)

    if needs_mask:
        # Lane mask for the ragged last spatial block (avoids any host-side pad):
        # global spatial index = k*tile_hw + 128*group + lane.
        lane = jax.lax.broadcasted_iota(jnp.int32, acc_ref.shape, 2)
        base = k * tile_hw

    n_groups = tile_hw // 128  # static

    # Pure VPU vreg adds per 128-lane group; no per-step cross-lane (XLU) work.
    @pl.loop(0, n_groups)
    def _accumulate(gi):
        off = pl.multiple_of(gi * 128, 128)
        chunk = x_ref[:, :, pl.ds(off, 128)].astype(jnp.float32)
        if needs_mask:
            chunk = jnp.where(base + off + lane < hw, chunk, 0.0)
        acc_ref[...] += chunk

    @pl.when(k == pl.num_programs(1) - 1)
    def _finalize():
        # Single cross-lane reduce per batch tile, then mean-scale + projection.
        pooled = jnp.sum(acc_ref[...], axis=-1) * inv_hw                # (tile_n, C)
        pooled = pooled.astype(proj_ref.dtype)
        out = jnp.dot(pooled, proj_ref[...], preferred_element_type=jnp.float32)
        o_ref[0] = out.astype(o_ref.dtype)


# ---------------------------------------------------------------------------
# Wrapper
# ---------------------------------------------------------------------------


def global_pool2d(x_nchw: jax.Array, proj: jax.Array,
                  *, block_budget_bytes: int = 8 * 1024 * 1024) -> jax.Array:
    """Equivalent of GlobalPool2D.forward: mean over (H, W) then `@ proj`.

    Args:
      x_nchw: (N, C, H, W) input (PyTorch NCHW convention).
      proj:   (C, out_dim) projection parameter.
    Returns:
      (N, out_dim) array.
    """
    N, C, H, W = x_nchw.shape
    C_p, out_dim = proj.shape
    assert C_p == C, f"proj first dim {C_p} must equal channels {C}"
    HW = H * W
    inv_hw = 1.0 / float(HW)
    out_dtype = jnp.result_type(x_nchw.dtype, proj.dtype)
    xbytes = jnp.dtype(x_nchw.dtype).itemsize

    # (N, C, H, W) -> (N, C, H*W): trailing-dim merge, no data movement.
    x = x_nchw.reshape(N, C, HW)

    # Small-channel packing: fold g = 8 // C batch items into the sublane axis
    # (sublane-dense vregs / VMEM) and make the projection block-diagonal so the
    # whole thing remains a single MXU matmul.  Leading-dim reshapes only.
    g = 1
    if C < 8 and 8 % C == 0 and N % (8 // C) == 0:
        g = 8 // C
    if g > 1:
        x = x.reshape(N // g, g * C, HW)
        proj_eff = jnp.kron(jnp.eye(g, dtype=proj.dtype), proj)   # (g*C, g*out_dim)
    else:
        proj_eff = proj
    n_eff = N // g
    c_eff = g * C
    d_eff = g * out_dim

    row_bytes = c_eff * HW * xbytes          # one batch row, full spatial extent
    vmem_limit = 48 * 1024 * 1024            # < v7x 64 MiB physical; fine on v5e/v6e

    if row_bytes <= block_budget_bytes:
        # -------- preferred path: full-HW contiguous blocks, 1-D batch grid --------
        tile_n = min(n_eff, max(1, block_budget_bytes // row_bytes))
        if tile_n < n_eff and tile_n >= 8:
            tile_n -= tile_n % 8             # sublane-friendly pooled/output tiles
        # v7x has 2 TensorCores: guarantee >= 2 tiles on the "parallel" axis when
        # there is enough batch to split.
        if tile_n == n_eff and N >= 16 and n_eff >= 2:
            tile_n = pl.cdiv(n_eff, 2)
        num_tiles = pl.cdiv(n_eff, tile_n)
        # Note: when num_tiles*tile_n > n_eff, the last input block reads past the
        # array (undefined values); batch rows are independent, so those rows only
        # produce garbage output rows which are sliced off below.  No jnp.pad copy.

        out3 = pl.pallas_call(
            functools.partial(_pool_proj_kernel_full, inv_hw=inv_hw),
            out_shape=jax.ShapeDtypeStruct((num_tiles, tile_n, d_eff), out_dtype),
            grid_spec=pltpu.PrefetchScalarGridSpec(
                num_scalar_prefetch=0,
                grid=(num_tiles,),
                in_specs=[
                    pl.BlockSpec((tile_n, c_eff, HW), lambda i: (i, 0, 0)),
                    pl.BlockSpec((c_eff, d_eff), lambda i: (0, 0)),
                ],
                out_specs=pl.BlockSpec((1, tile_n, d_eff), lambda i: (i, 0, 0)),
            ),
            compiler_params=pltpu.CompilerParams(
                dimension_semantics=("parallel",),
                vmem_limit_bytes=vmem_limit,
            ),
        )(x, proj_eff)
    else:
        # -------- fallback: split the spatial axis (innermost reduction axis) --------
        tile_n = 1                           # shrink batch first (keeps blocks contiguous)
        lane_bytes = c_eff * 128 * xbytes
        if lane_bytes > block_budget_bytes:
            # TODO(synk): K-split (channel-axis) matmul accumulation for extremely
            # wide channel counts; not needed for realistic GlobalPool2D shapes.
            raise NotImplementedError(
                f"in_dim={C} is too wide for a single 128-lane VMEM block "
                f"({lane_bytes} B > {block_budget_bytes} B budget)")
        tile_hw = (block_budget_bytes // lane_bytes) * 128
        tile_hw = max(128, min(tile_hw, (HW // 128) * 128))
        num_hw = pl.cdiv(HW, tile_hw)
        needs_mask = (HW % tile_hw) != 0     # ragged last block handled in-kernel

        out3 = pl.pallas_call(
            functools.partial(_pool_proj_kernel_split, inv_hw=inv_hw, hw=HW,
                              tile_hw=tile_hw, needs_mask=needs_mask),
            out_shape=jax.ShapeDtypeStruct((n_eff, tile_n, d_eff), out_dtype),
            grid_spec=pltpu.PrefetchScalarGridSpec(
                num_scalar_prefetch=0,
                grid=(n_eff, num_hw),
                in_specs=[
                    pl.BlockSpec((tile_n, c_eff, tile_hw), lambda i, k: (i, 0, k)),
                    pl.BlockSpec((c_eff, d_eff), lambda i, k: (0, 0)),
                ],
                out_specs=pl.BlockSpec((1, tile_n, d_eff), lambda i, k: (i, 0, 0)),
                scratch_shapes=[pltpu.VMEM((tile_n, c_eff, 128), jnp.float32)],
            ),
            compiler_params=pltpu.CompilerParams(
                dimension_semantics=("parallel", "arbitrary"),
                vmem_limit_bytes=vmem_limit,
            ),
        )(x, proj_eff)

    out = out3.reshape(-1, d_eff)[:n_eff]    # drop garbage rows from ragged batch tile
    if g > 1:
        out = out.reshape(N, out_dim)        # ungroup: trailing-dim split, free
    return out


if __name__ == "__main__":
    # Small shapes consistent with the module:
    #   batch=2, in_dim(channels)=4, spatial=16x16, out_dim=32
    N, C, H, W = 2, 4, 16, 16
    out_dim = 32

    key = jax.random.PRNGKey(0)
    kx, kp = jax.random.split(key)

    x = jax.random.normal(kx, (N, C, H, W), dtype=jnp.float32)
    # Deterministic parameter init matching __init__: scale * randn(in_dim, out_dim)
    scale = C ** (-0.5)
    proj = scale * jax.random.normal(kp, (C, out_dim), dtype=jnp.float32)

    out = global_pool2d(x, proj)
    out = jax.block_until_ready(out)

    # Pure-JAX reference check of the forward semantics.
    ref = jnp.mean(x, axis=(-2, -1)) @ proj
    assert out.shape == (N, out_dim), out.shape
    assert jnp.allclose(out, ref, atol=1e-5, rtol=1e-5), float(jnp.max(jnp.abs(out - ref)))

    print("KERNEL_OK")
</pallas_src>

<mosaic_0001>
module attributes {stable_mosaic.version = 11 : i64} {
  func.func @_pool_proj_kernel_full(%arg0: i32, %arg1: memref<1x8x256xf32, #tpu.memory_space<vmem>>, %arg2: memref<8x64xf32, #tpu.memory_space<vmem>>, %arg3: memref<1x1x64xf32, #tpu.memory_space<vmem>>) attributes {dimension_semantics = [#tpu.dimension_semantics<parallel>], iteration_bounds = array<i64: 1>, scalar_prefetch = 0 : i64, scratch_operands = 0 : i64, tpu.core_type = #tpu.core_type<tc>, window_params = [{transform_indices = @transform_0, window_bounds = array<i64: 1, 8, 256>}, {pipeline_mode = #tpu.pipeline_mode<synchronous>, transform_indices = @transform_1, window_bounds = array<i64: 8, 64>}, {transform_indices = @transform_2, window_bounds = array<i64: 1, 1, 64>}]} {
    %c0 = arith.constant 0 : index
    %c0_0 = arith.constant 0 : index
    %c0_1 = arith.constant 0 : index
    %0 = vector.load %arg1[%c0, %c0_0, %c0_1] : memref<1x8x256xf32, #tpu.memory_space<vmem>>, vector<1x8x256xf32>
    %cst = arith.constant dense<0.000000e+00> : vector<1x8xf32>
    %1 = vector.multi_reduction <add>, %0, %cst [2] : vector<1x8x256xf32> to vector<1x8xf32>
    %cst_2 = arith.constant 3.906250e-03 : f32
    %2 = vector.broadcast %cst_2 : f32 to vector<1x8xf32>
    %3 = arith.mulf %1, %2 : vector<1x8xf32>
    %c0_3 = arith.constant 0 : index
    %c0_4 = arith.constant 0 : index
    %4 = vector.load %arg2[%c0_3, %c0_4] : memref<8x64xf32, #tpu.memory_space<vmem>>, vector<8x64xf32>
    %cst_5 = arith.constant dense<0.000000e+00> : vector<1x64xf32>
    %5 = tpu.matmul %3, %4, %cst_5 {dimension_numbers = #tpu.dot_dimension_numbers<[1], [0], [0], [1], [0, 0, 1, 1], [], []>} : vector<1x8xf32>, vector<8x64xf32>, vector<1x64xf32> -> vector<1x64xf32>
    %c0_6 = arith.constant 0 : index
    %c0_7 = arith.constant 0 : index
    %c0_8 = arith.constant 0 : index
    %6 = vector.load %arg3[%c0_6, %c0_7, %c0_8] : memref<1x1x64xf32, #tpu.memory_space<vmem>>, vector<1x1x64xf32>
    %7 = vector.shape_cast %6 : vector<1x1x64xf32> to vector<1x64xf32>
    %8 = vector.shape_cast %5 : vector<1x64xf32> to vector<1x1x64xf32>
    tpu.vector_store %arg3[%c0_6, %c0_7, %c0_8], %8 {strides = array<i32>} : memref<1x1x64xf32, #tpu.memory_space<vmem>>, vector<1x1x64xf32>,
    return
  }
  func.func @transform_0(%arg0: i32) -> (i32, i32, i32) {
    %c0_i32 = arith.constant 0 : i32
    %c0_i32_0 = arith.constant 0 : i32
    %c0_i32_1 = arith.constant 0 : i32
    return %arg0, %c0_i32, %c0_i32_0 : i32, i32, i32
  }
  func.func @transform_1(%arg0: i32) -> (i32, i32) {
    %c0_i32 = arith.constant 0 : i32
    %c0_i32_0 = arith.constant 0 : i32
    %c0_i32_1 = arith.constant 0 : i32
    return %c0_i32, %c0_i32_0 : i32, i32
  }
  func.func @transform_2(%arg0: i32) -> (i32, i32, i32) {
    %c0_i32 = arith.constant 0 : i32
    %c0_i32_0 = arith.constant 0 : i32
    %c0_i32_1 = arith.constant 0 : i32
    return %arg0, %c0_i32, %c0_i32_0 : i32, i32, i32
  }
}

</mosaic_0001>

<llo_original>
// kernel: tpu_custom_call.1
$region0: #{tpu_custom_call.1}
  #allocation0 [shape = 'u32[]', space=smem, size = 0x4, offset = 0x4, fixed_abs, tag = 'smem constant byte address 0x4 - core index']
  #allocation1 [shape = 'u32[72,128]{1,0:T(1,128)}', space=vmem, size = 0x9000, scoped, tag = 'internal scratch']
  %s0 = inlined_call_operand.hbm [shape: f32[1,8,256], index: 0, kind: input, shape index: {}]
  %s1 = inlined_call_operand.hbm [shape: f32[8,64], index: 1, kind: input, shape index: {}]
  %s2 = inlined_call_operand.hbm [shape: f32[1,1,64], index: 2, kind: output, shape index: {}]
  %s3 = sld [smem:[#allocation0]]
  $region26: #{tpu_custom_call.1} parent=0
    _
  %s5 = ssub.s32 1, %s3
  %s6 = scalar_select 0, %s5, %s3
  $region1: #{tpu_custom_call.1} parent=0
    #allocation2 [shape = 'u8[8192]{0}', space=vmem, size = 0x2000, scoped, tag = 'input window, operand 0, single buffered']
    #allocation3 [shape = 's32[1]{0}', space=sflag, size = 0x4, scoped, tag = 'scoped memory for tpu_custom_call.1']
    #allocation4 [shape = 's32[1]{0}', space=sflag, size = 0x4, scoped, tag = 'scoped memory for tpu_custom_call.1']
    #allocation5 [shape = 'u8[4096]{0}', space=vmem, size = 0x1000, scoped, tag = 'input window, operand 1, single buffered']
    #allocation6 [shape = 's32[1]{0}', space=sflag, size = 0x4, scoped, tag = 'scoped memory for tpu_custom_call.1']
    #allocation7 [shape = 'u8[512]{0}', space=vmem, size = 0x400, scoped, tag = 'output window, operand 0, single buffered']
    %7 = vsyncpa [#allocation3], 0
    %8 = vsyncpa [#allocation6], 0
    %9 = vsyncpa [#allocation4], 0
    // Predicated region
    $region2: #{tpu_custom_call.1} parent=1 // pred_check
      _
    $region3: #{tpu_custom_call.1} parent=1 // pred_check_branch
      %11 = sbr.rel (0) target = $region5
    $region4: #{tpu_custom_call.1} parent=1 // pred_region
      %13 = vsyncadd [#allocation3], 0
      %s15 = sshll.u32 %s0, 4
      %s16 = int_to_ptr.hbm [resolvable:$true] %s15
      %s17 = sshll.u32 [#allocation2], 4
      %s18 = int_to_ptr.vmem [resolvable:$true] %s17
      %20 = dma.hbm_to_vmem [thread:$0]  %s16, 256, %s18, [#allocation3]
    $region5: #{tpu_custom_call.1} parent=1 // pred_fallthru
      _
    // Predicated region
    $region6: #{tpu_custom_call.1} parent=1 // pred_check
      _
    $region7: #{tpu_custom_call.1} parent=1 // pred_check_branch
      %22 = sbr.rel (0) target = $region9
    $region8: #{tpu_custom_call.1} parent=1 // pred_region
      %24 = vsyncadd [#allocation6], 0
      %s26 = sshll.u32 %s1, 4
      %s27 = int_to_ptr.hbm [resolvable:$true] %s26
      %s28 = sshll.u32 [#allocation5], 4
      %s29 = int_to_ptr.vmem [resolvable:$true] %s28
      %31 = dma.hbm_to_vmem [thread:$0]  %s27, 128, %s29, [#allocation6]
    $region9: #{tpu_custom_call.1} parent=1 // pred_fallthru
      _
    // Predicated region
    $region10: #{tpu_custom_call.1} parent=1 // pred_check
      _
    $region11: #{tpu_custom_call.1} parent=1 // pred_check_branch
      %33 = sbr.rel (0) target = $region13
    $region12: #{tpu_custom_call.1} parent=1 // pred_region
      %35 = dma.done [#allocation3], 256
    $region13: #{tpu_custom_call.1} parent=1 // pred_fallthru
      _
    // Predicated region
    $region14: #{tpu_custom_call.1} parent=1 // pred_check
      _
    $region15: #{tpu_custom_call.1} parent=1 // pred_check_branch
      %37 = sbr.rel (0) target = $region17
    $region16: #{tpu_custom_call.1} parent=1 // pred_region
      %39 = dma.done [#allocation6], 128
    $region17: #{tpu_custom_call.1} parent=1 // pred_fallthru
      _
    %v40 = vld [vmem:[#allocation2] sm:$0xff]
    %v41 = vld [vmem:[#allocation2 + $0x8] sm:$0xff]
    %v42 = vadd.f32 %v40, %v41
    %43 = vadd.xlane.f32.xlu0 %v42
    %v44 = vpop.xlane.xlu0 %43
    %v45 = vmul.f32 %v44, 0.00390625
    %v46 = vld [vmem:[#allocation5] sm:$0xff]
    %v48 = vlaneseq
    %v49 = vand.u32 %v48, 127
    %v50 = vperm.slane %v45, %v49
    %vm51 = vcmask 64512
    %v52 = vsel %vm51, %v50, 0
    %54 = vmatpush.msra.mxu0 0.0
    %55 = vmatpush.msra.mxu0 0.0
    %56 = vmatpush.msra.mxu0 0.0
    %57 = vmatpush.msra.mxu0 0.0
    %58 = vmatpush.msra.mxu0 0.0
    %59 = vmatpush.msra.mxu0 0.0
    %60 = vmatpush.msra.mxu0 0.0
    %61 = vmatpush.msra.mxu0 0.0
    %62 = vmatpush.msra.mxu0 0.0
    %63 = vmatpush.msra.mxu0 0.0
    %64 = vmatpush.msra.mxu0 0.0
    %65 = vmatpush.msra.mxu0 0.0
    %66 = vmatpush.msra.mxu0 0.0
    %67 = vmatpush.msra.mxu0 0.0
    %68 = vmatpush.msra.mxu0 0.0
    %69 = vmatpush.msra.mxu0 %v46
    %70 = vmatmul.f32.gmra.mxu0 %v52
    %v71 = vpop.f32.mrf.mxu0
    %v72 = vadd.f32 0.0, %v71
    %73 = vdwg.mxu0
    %vm74 = vcmask 516096
    %75 = vst.msk [vmem:[#allocation7] sm:$0x1] %vm74, %v72
    // Predicated region
    $region18: #{tpu_custom_call.1} parent=1 // pred_check
      _
    $region19: #{tpu_custom_call.1} parent=1 // pred_check_branch
      %77 = sbr.rel (0) target = $region21
    $region20: #{tpu_custom_call.1} parent=1 // pred_region
      %79 = vsyncadd [#allocation4], 0
      %s81 = sshll.u32 [#allocation7], 4
      %s82 = int_to_ptr.vmem [resolvable:$true] %s81
      %s83 = sshll.u32 %s2, 4
      %s84 = int_to_ptr.hbm [resolvable:$true] %s83
      %86 = dma.vmem_to_hbm [thread:$0]  %s82, 16, %s84, [#allocation4]
    $region21: #{tpu_custom_call.1} parent=1 // pred_fallthru
      _
    // Predicated region
    $region22: #{tpu_custom_call.1} parent=1 // pred_check
      _
    $region23: #{tpu_custom_call.1} parent=1 // pred_check_branch
      %88 = sbr.rel (0) target = $region25
    $region24: #{tpu_custom_call.1} parent=1 // pred_region
      %90 = dma.done [#allocation4], 16
    $region25: #{tpu_custom_call.1} parent=1 // pred_fallthru
      _
    %91 = vsyncpa [#allocation3], 1
    %92 = vsyncpa [#allocation6], 1
    %93 = vsyncpa [#allocation4], 1

</llo_original>
